<compile_context>
chip_gen: v7x
topology: tpu7x:2x2x1
jax: 0.10.0
libtpu: 0.0.40
codegen_flags: <defaults>
</compile_context>

<pallas_src>
import jax
import jax.numpy as jnp
from jax.experimental import pallas as pl
from jax.experimental.pallas import tpu as pltpu

LANES = 128     # vreg lane width
SUBLANES = 8    # f32 sublane count


def mlp_kernel(x_ref, w1_ref, b1_ref, w2_ref, b2_ref, o_ref):
    """Lane-dense MLP. x_ref/o_ref: (TR, 128) slabs of batch elements.
    w1/b1/w2/b2: tiny SMEM vectors read as scalars."""
    x = x_ref[...]                                        # (TR, 128) f32
    acc = jnp.zeros_like(x) + b2_ref[0]                   # broadcast out-bias
    for j in range(w1_ref.shape[0]):                      # H = 10, static unroll
        h = jnp.maximum(w1_ref[j] * x + b1_ref[j], 0.0)   # hidden1 + ReLU
        acc = acc + w2_ref[j] * h                         # out-layer FMA
    o_ref[...] = acc


def net_forward(x, w1, b1, w2, b2, *, max_tile_rows=512):
    """x: (B, 1) f32.
    w1: (H,) = hidden1.weight[:, 0]   (D_in == 1)
    b1: (H,) = hidden1.bias
    w2: (H,) = out.weight[0, :]       (D_out == 1)
    b2: (1,) = out.bias
    Returns (B, 1) f32."""
    B, D_in = x.shape
    assert D_in == 1 and w1.ndim == 1

    # ---- lane-dense re-layout of the batch --------------------------------
    rows_needed = pl.cdiv(B, LANES)
    rows = pl.cdiv(rows_needed, SUBLANES) * SUBLANES        # sublane aligned
    n_steps = pl.cdiv(rows, max_tile_rows)
    if n_steps > 1 and n_steps % 2 == 1:
        n_steps += 1            # even step count: both v7x TCs get equal work
    tile_rows = pl.cdiv(pl.cdiv(rows, n_steps), SUBLANES) * SUBLANES
    rows_p = n_steps * tile_rows

    xf = jnp.pad(x.reshape(-1), (0, rows_p * LANES - B))
    x2 = xf.reshape(rows_p, LANES)                          # lane-dense slab

    smem = pl.BlockSpec(memory_space=pltpu.MemorySpace.SMEM)
    out = pl.pallas_call(
        mlp_kernel,
        out_shape=jax.ShapeDtypeStruct((rows_p, LANES), jnp.float32),
        grid=(n_steps,),
        in_specs=[
            pl.BlockSpec((tile_rows, LANES), lambda i: (i, 0)),   # streamed x
            smem, smem, smem, smem,                               # params
        ],
        out_specs=pl.BlockSpec((tile_rows, LANES), lambda i: (i, 0)),
        compiler_params=pltpu.CompilerParams(
            dimension_semantics=("parallel",)),   # shard batch across v7x TCs
    )(x2, w1, b1, w2, b2)

    # Drop padding rows (their values are relu(b1)@w2 + b2 garbage) and
    # restore the (B, 1) shape of the PyTorch module.
    return out.reshape(-1)[:B].reshape(B, 1)


def init_params(key, D_in, H, D_out):
    """PyTorch-style init: U(-1/sqrt(fan_in), 1/sqrt(fan_in)), flat layout."""
    assert D_in == 1 and D_out == 1
    k1, k2, k3, k4 = jax.random.split(key, 4)
    bound1 = 1.0 / (D_in ** 0.5)
    bound2 = 1.0 / (H ** 0.5)
    w1 = jax.random.uniform(k1, (H,), jnp.float32, -bound1, bound1)  # hidden1.weight[:,0]
    b1 = jax.random.uniform(k2, (H,), jnp.float32, -bound1, bound1)  # hidden1.bias
    w2 = jax.random.uniform(k3, (H,), jnp.float32, -bound2, bound2)  # out.weight[0,:]
    b2 = jax.random.uniform(k4, (1,), jnp.float32, -bound2, bound2)  # out.bias
    return w1, b1, w2, b2


if __name__ == "__main__":
    D_in, H, D_out = 1, 10, 1   # Net(1, 10, 1)
    key = jax.random.PRNGKey(0)
    w1, b1, w2, b2 = init_params(key, D_in, H, D_out)

    def ref_fwd(xx):
        h = jnp.maximum(xx * w1[None, :] + b1[None, :], 0.0)    # (B, H)
        return h @ w2[:, None] + b2[None, :]                    # (B, 1)

    # 1) Original reference input: torch.Tensor([[0.5]])
    x1 = jnp.array([[0.5]], dtype=jnp.float32)
    o1 = net_forward(x1, w1, b1, w2, b2)
    jax.block_until_ready(o1)
    assert o1.shape == (1, 1)
    assert jnp.allclose(o1, ref_fwd(x1), atol=1e-5, rtol=1e-5)

    # 2) Batched input: exercises the lane-dense slab path.
    xb = jax.random.uniform(jax.random.PRNGKey(1), (256, D_in), jnp.float32,
                            minval=-1.0, maxval=1.0)
    ob = net_forward(xb, w1, b1, w2, b2)
    jax.block_until_ready(ob)
    assert ob.shape == (256, 1)
    assert jnp.allclose(ob, ref_fwd(xb), atol=1e-5, rtol=1e-5)

    print("KERNEL_OK")
</pallas_src>

<mosaic_0001>
module attributes {stable_mosaic.version = 11 : i64} {
  func.func @mlp_kernel(%arg0: i32, %arg1: memref<8x128xf32, #tpu.memory_space<vmem>>, %arg2: memref<10xf32, #tpu.memory_space<smem>>, %arg3: memref<10xf32, #tpu.memory_space<smem>>, %arg4: memref<10xf32, #tpu.memory_space<smem>>, %arg5: memref<1xf32, #tpu.memory_space<smem>>, %arg6: memref<8x128xf32, #tpu.memory_space<vmem>>) attributes {dimension_semantics = [#tpu.dimension_semantics<parallel>], iteration_bounds = array<i64: 1>, scalar_prefetch = 0 : i64, scratch_operands = 0 : i64, tpu.core_type = #tpu.core_type<tc>, window_params = [{transform_indices = @transform_0, window_bounds = array<i64: 8, 128>}, {transform_indices = @transform_1, window_bounds = array<i64: 10>}, {transform_indices = @transform_2, window_bounds = array<i64: 10>}, {transform_indices = @transform_3, window_bounds = array<i64: 10>}, {transform_indices = @transform_4, window_bounds = array<i64: 1>}, {transform_indices = @transform_5, window_bounds = array<i64: 8, 128>}]} {
    %c0 = arith.constant 0 : index
    %c0_0 = arith.constant 0 : index
    %0 = vector.load %arg1[%c0, %c0_0] : memref<8x128xf32, #tpu.memory_space<vmem>>, vector<8x128xf32>
    %cst = arith.constant 0.000000e+00 : f32
    %1 = vector.broadcast %cst : f32 to vector<8x128xf32>
    %c0_1 = arith.constant 0 : index
    %2 = memref.load %arg5[%c0_1] : memref<1xf32, #tpu.memory_space<smem>>
    %3 = vector.broadcast %2 : f32 to vector<8x128xf32>
    %4 = arith.addf %1, %3 : vector<8x128xf32>
    %c0_2 = arith.constant 0 : index
    %5 = memref.load %arg2[%c0_2] : memref<10xf32, #tpu.memory_space<smem>>
    %6 = vector.broadcast %5 : f32 to vector<8x128xf32>
    %7 = arith.mulf %6, %0 : vector<8x128xf32>
    %c0_3 = arith.constant 0 : index
    %8 = memref.load %arg3[%c0_3] : memref<10xf32, #tpu.memory_space<smem>>
    %9 = vector.broadcast %8 : f32 to vector<8x128xf32>
    %10 = arith.addf %7, %9 : vector<8x128xf32>
    %cst_4 = arith.constant 0.000000e+00 : f32
    %11 = vector.broadcast %cst_4 : f32 to vector<8x128xf32>
    %12 = arith.maximumf %10, %11 : vector<8x128xf32>
    %c0_5 = arith.constant 0 : index
    %13 = memref.load %arg4[%c0_5] : memref<10xf32, #tpu.memory_space<smem>>
    %14 = vector.broadcast %13 : f32 to vector<8x128xf32>
    %15 = arith.mulf %14, %12 : vector<8x128xf32>
    %16 = arith.addf %4, %15 : vector<8x128xf32>
    %c1 = arith.constant 1 : index
    %17 = memref.load %arg2[%c1] : memref<10xf32, #tpu.memory_space<smem>>
    %18 = vector.broadcast %17 : f32 to vector<8x128xf32>
    %19 = arith.mulf %18, %0 : vector<8x128xf32>
    %c1_6 = arith.constant 1 : index
    %20 = memref.load %arg3[%c1_6] : memref<10xf32, #tpu.memory_space<smem>>
    %21 = vector.broadcast %20 : f32 to vector<8x128xf32>
    %22 = arith.addf %19, %21 : vector<8x128xf32>
    %cst_7 = arith.constant 0.000000e+00 : f32
    %23 = vector.broadcast %cst_7 : f32 to vector<8x128xf32>
    %24 = arith.maximumf %22, %23 : vector<8x128xf32>
    %c1_8 = arith.constant 1 : index
    %25 = memref.load %arg4[%c1_8] : memref<10xf32, #tpu.memory_space<smem>>
    %26 = vector.broadcast %25 : f32 to vector<8x128xf32>
    %27 = arith.mulf %26, %24 : vector<8x128xf32>
    %28 = arith.addf %16, %27 : vector<8x128xf32>
    %c2 = arith.constant 2 : index
    %29 = memref.load %arg2[%c2] : memref<10xf32, #tpu.memory_space<smem>>
    %30 = vector.broadcast %29 : f32 to vector<8x128xf32>
    %31 = arith.mulf %30, %0 : vector<8x128xf32>
    %c2_9 = arith.constant 2 : index
    %32 = memref.load %arg3[%c2_9] : memref<10xf32, #tpu.memory_space<smem>>
    %33 = vector.broadcast %32 : f32 to vector<8x128xf32>
    %34 = arith.addf %31, %33 : vector<8x128xf32>
    %cst_10 = arith.constant 0.000000e+00 : f32
    %35 = vector.broadcast %cst_10 : f32 to vector<8x128xf32>
    %36 = arith.maximumf %34, %35 : vector<8x128xf32>
    %c2_11 = arith.constant 2 : index
    %37 = memref.load %arg4[%c2_11] : memref<10xf32, #tpu.memory_space<smem>>
    %38 = vector.broadcast %37 : f32 to vector<8x128xf32>
    %39 = arith.mulf %38, %36 : vector<8x128xf32>
    %40 = arith.addf %28, %39 : vector<8x128xf32>
    %c3 = arith.constant 3 : index
    %41 = memref.load %arg2[%c3] : memref<10xf32, #tpu.memory_space<smem>>
    %42 = vector.broadcast %41 : f32 to vector<8x128xf32>
    %43 = arith.mulf %42, %0 : vector<8x128xf32>
    %c3_12 = arith.constant 3 : index
    %44 = memref.load %arg3[%c3_12] : memref<10xf32, #tpu.memory_space<smem>>
    %45 = vector.broadcast %44 : f32 to vector<8x128xf32>
    %46 = arith.addf %43, %45 : vector<8x128xf32>
    %cst_13 = arith.constant 0.000000e+00 : f32
    %47 = vector.broadcast %cst_13 : f32 to vector<8x128xf32>
    %48 = arith.maximumf %46, %47 : vector<8x128xf32>
    %c3_14 = arith.constant 3 : index
    %49 = memref.load %arg4[%c3_14] : memref<10xf32, #tpu.memory_space<smem>>
    %50 = vector.broadcast %49 : f32 to vector<8x128xf32>
    %51 = arith.mulf %50, %48 : vector<8x128xf32>
    %52 = arith.addf %40, %51 : vector<8x128xf32>
    %c4 = arith.constant 4 : index
    %53 = memref.load %arg2[%c4] : memref<10xf32, #tpu.memory_space<smem>>
    %54 = vector.broadcast %53 : f32 to vector<8x128xf32>
    %55 = arith.mulf %54, %0 : vector<8x128xf32>
    %c4_15 = arith.constant 4 : index
    %56 = memref.load %arg3[%c4_15] : memref<10xf32, #tpu.memory_space<smem>>
    %57 = vector.broadcast %56 : f32 to vector<8x128xf32>
    %58 = arith.addf %55, %57 : vector<8x128xf32>
    %cst_16 = arith.constant 0.000000e+00 : f32
    %59 = vector.broadcast %cst_16 : f32 to vector<8x128xf32>
    %60 = arith.maximumf %58, %59 : vector<8x128xf32>
    %c4_17 = arith.constant 4 : index
    %61 = memref.load %arg4[%c4_17] : memref<10xf32, #tpu.memory_space<smem>>
    %62 = vector.broadcast %61 : f32 to vector<8x128xf32>
    %63 = arith.mulf %62, %60 : vector<8x128xf32>
    %64 = arith.addf %52, %63 : vector<8x128xf32>
    %c5 = arith.constant 5 : index
    %65 = memref.load %arg2[%c5] : memref<10xf32, #tpu.memory_space<smem>>
    %66 = vector.broadcast %65 : f32 to vector<8x128xf32>
    %67 = arith.mulf %66, %0 : vector<8x128xf32>
    %c5_18 = arith.constant 5 : index
    %68 = memref.load %arg3[%c5_18] : memref<10xf32, #tpu.memory_space<smem>>
    %69 = vector.broadcast %68 : f32 to vector<8x128xf32>
    %70 = arith.addf %67, %69 : vector<8x128xf32>
    %cst_19 = arith.constant 0.000000e+00 : f32
    %71 = vector.broadcast %cst_19 : f32 to vector<8x128xf32>
    %72 = arith.maximumf %70, %71 : vector<8x128xf32>
    %c5_20 = arith.constant 5 : index
    %73 = memref.load %arg4[%c5_20] : memref<10xf32, #tpu.memory_space<smem>>
    %74 = vector.broadcast %73 : f32 to vector<8x128xf32>
    %75 = arith.mulf %74, %72 : vector<8x128xf32>
    %76 = arith.addf %64, %75 : vector<8x128xf32>
    %c6 = arith.constant 6 : index
    %77 = memref.load %arg2[%c6] : memref<10xf32, #tpu.memory_space<smem>>
    %78 = vector.broadcast %77 : f32 to vector<8x128xf32>
    %79 = arith.mulf %78, %0 : vector<8x128xf32>
    %c6_21 = arith.constant 6 : index
    %80 = memref.load %arg3[%c6_21] : memref<10xf32, #tpu.memory_space<smem>>
    %81 = vector.broadcast %80 : f32 to vector<8x128xf32>
    %82 = arith.addf %79, %81 : vector<8x128xf32>
    %cst_22 = arith.constant 0.000000e+00 : f32
    %83 = vector.broadcast %cst_22 : f32 to vector<8x128xf32>
    %84 = arith.maximumf %82, %83 : vector<8x128xf32>
    %c6_23 = arith.constant 6 : index
    %85 = memref.load %arg4[%c6_23] : memref<10xf32, #tpu.memory_space<smem>>
    %86 = vector.broadcast %85 : f32 to vector<8x128xf32>
    %87 = arith.mulf %86, %84 : vector<8x128xf32>
    %88 = arith.addf %76, %87 : vector<8x128xf32>
    %c7 = arith.constant 7 : index
    %89 = memref.load %arg2[%c7] : memref<10xf32, #tpu.memory_space<smem>>
    %90 = vector.broadcast %89 : f32 to vector<8x128xf32>
    %91 = arith.mulf %90, %0 : vector<8x128xf32>
    %c7_24 = arith.constant 7 : index
    %92 = memref.load %arg3[%c7_24] : memref<10xf32, #tpu.memory_space<smem>>
    %93 = vector.broadcast %92 : f32 to vector<8x128xf32>
    %94 = arith.addf %91, %93 : vector<8x128xf32>
    %cst_25 = arith.constant 0.000000e+00 : f32
    %95 = vector.broadcast %cst_25 : f32 to vector<8x128xf32>
    %96 = arith.maximumf %94, %95 : vector<8x128xf32>
    %c7_26 = arith.constant 7 : index
    %97 = memref.load %arg4[%c7_26] : memref<10xf32, #tpu.memory_space<smem>>
    %98 = vector.broadcast %97 : f32 to vector<8x128xf32>
    %99 = arith.mulf %98, %96 : vector<8x128xf32>
    %100 = arith.addf %88, %99 : vector<8x128xf32>
    %c8 = arith.constant 8 : index
    %101 = memref.load %arg2[%c8] : memref<10xf32, #tpu.memory_space<smem>>
    %102 = vector.broadcast %101 : f32 to vector<8x128xf32>
    %103 = arith.mulf %102, %0 : vector<8x128xf32>
    %c8_27 = arith.constant 8 : index
    %104 = memref.load %arg3[%c8_27] : memref<10xf32, #tpu.memory_space<smem>>
    %105 = vector.broadcast %104 : f32 to vector<8x128xf32>
    %106 = arith.addf %103, %105 : vector<8x128xf32>
    %cst_28 = arith.constant 0.000000e+00 : f32
    %107 = vector.broadcast %cst_28 : f32 to vector<8x128xf32>
    %108 = arith.maximumf %106, %107 : vector<8x128xf32>
    %c8_29 = arith.constant 8 : index
    %109 = memref.load %arg4[%c8_29] : memref<10xf32, #tpu.memory_space<smem>>
    %110 = vector.broadcast %109 : f32 to vector<8x128xf32>
    %111 = arith.mulf %110, %108 : vector<8x128xf32>
    %112 = arith.addf %100, %111 : vector<8x128xf32>
    %c9 = arith.constant 9 : index
    %113 = memref.load %arg2[%c9] : memref<10xf32, #tpu.memory_space<smem>>
    %114 = vector.broadcast %113 : f32 to vector<8x128xf32>
    %115 = arith.mulf %114, %0 : vector<8x128xf32>
    %c9_30 = arith.constant 9 : index
    %116 = memref.load %arg3[%c9_30] : memref<10xf32, #tpu.memory_space<smem>>
    %117 = vector.broadcast %116 : f32 to vector<8x128xf32>
    %118 = arith.addf %115, %117 : vector<8x128xf32>
    %cst_31 = arith.constant 0.000000e+00 : f32
    %119 = vector.broadcast %cst_31 : f32 to vector<8x128xf32>
    %120 = arith.maximumf %118, %119 : vector<8x128xf32>
    %c9_32 = arith.constant 9 : index
    %121 = memref.load %arg4[%c9_32] : memref<10xf32, #tpu.memory_space<smem>>
    %122 = vector.broadcast %121 : f32 to vector<8x128xf32>
    %123 = arith.mulf %122, %120 : vector<8x128xf32>
    %124 = arith.addf %112, %123 : vector<8x128xf32>
    %c0_33 = arith.constant 0 : index
    %c0_34 = arith.constant 0 : index
    %125 = vector.load %arg6[%c0_33, %c0_34] : memref<8x128xf32, #tpu.memory_space<vmem>>, vector<8x128xf32>
    tpu.vector_store %arg6[%c0_33, %c0_34], %124 {strides = array<i32>} : memref<8x128xf32, #tpu.memory_space<vmem>>, vector<8x128xf32>,
    return
  }
  func.func @transform_0(%arg0: i32) -> (i32, i32) {
    %c0_i32 = arith.constant 0 : i32
    %c0_i32_0 = arith.constant 0 : i32
    return %arg0, %c0_i32 : i32, i32
  }
  func.func @transform_1(%arg0: i32) -> i32 {
    %c0_i32 = arith.constant 0 : i32
    %c0_i32_0 = arith.constant 0 : i32
    return %c0_i32 : i32
  }
  func.func @transform_2(%arg0: i32) -> i32 {
    %c0_i32 = arith.constant 0 : i32
    %c0_i32_0 = arith.constant 0 : i32
    return %c0_i32 : i32
  }
  func.func @transform_3(%arg0: i32) -> i32 {
    %c0_i32 = arith.constant 0 : i32
    %c0_i32_0 = arith.constant 0 : i32
    return %c0_i32 : i32
  }
  func.func @transform_4(%arg0: i32) -> i32 {
    %c0_i32 = arith.constant 0 : i32
    %c0_i32_0 = arith.constant 0 : i32
    return %c0_i32 : i32
  }
  func.func @transform_5(%arg0: i32) -> (i32, i32) {
    %c0_i32 = arith.constant 0 : i32
    %c0_i32_0 = arith.constant 0 : i32
    return %arg0, %c0_i32 : i32, i32
  }
}

</mosaic_0001>

<llo_original>
// kernel: tpu_custom_call.1
$region0: #{tpu_custom_call.1}
  #allocation0 [shape = 'u32[]', space=smem, size = 0x4, offset = 0x4, fixed_abs, tag = 'smem constant byte address 0x4 - core index']
  #allocation1 [shape = 'u32[144,128]{1,0:T(1,128)}', space=vmem, size = 0x12000, scoped, tag = 'internal scratch']
  #allocation2 [shape = 'f32[1]{0:T(128)S(6)}', space=smem, size = 0x200, scoped, tag = 'scoped memory for tpu_custom_call.1']
  %s0 = inlined_call_operand.hbm [shape: f32[8,128], index: 0, kind: input, shape index: {}]
  %s1 = inlined_call_operand.vmem [shape: f32[10], index: 1, kind: input, shape index: {}]
  %s2 = inlined_call_operand.vmem [shape: f32[10], index: 2, kind: input, shape index: {}]
  %s3 = inlined_call_operand.vmem [shape: f32[10], index: 3, kind: input, shape index: {}]
  %s4 = inlined_call_operand.<no memory space> [shape: f32[1], index: 4, kind: input, shape index: {}]
  %s5 = inlined_call_operand.hbm [shape: f32[8,128], index: 5, kind: output, shape index: {}]
  %s6 = sld [smem:[#allocation0]]
  $region46: #{tpu_custom_call.1} parent=0
    _
  %s8 = ssub.s32 1, %s6
  %s9 = scalar_select 0, %s8, %s6
  %10 = sst [smem:[#allocation2]] %s4
  $region1: #{tpu_custom_call.1} parent=0
    #allocation3 [shape = 'u8[4096]{0}', space=vmem, size = 0x1000, scoped, tag = 'input window, operand 0, single buffered']
    #allocation4 [shape = 's32[1]{0}', space=sflag, size = 0x4, scoped, tag = 'scoped memory for tpu_custom_call.1']
    #allocation5 [shape = 's32[1]{0}', space=sflag, size = 0x4, scoped, tag = 'scoped memory for tpu_custom_call.1']
    #allocation6 [shape = 's32[1]{0}', space=sflag, size = 0x4, scoped, tag = 'scoped memory for tpu_custom_call.1']
    #allocation7 [shape = 'u8[512]{0}', space=smem, size = 0x200, scoped, tag = 'input window, operand 1, single buffered']
    #allocation8 [shape = 'u8[512]{0}', space=smem, size = 0x200, scoped, tag = 'input window, operand 2, single buffered']
    #allocation9 [shape = 's32[1]{0}', space=sflag, size = 0x4, scoped, tag = 'scoped memory for tpu_custom_call.1']
    #allocation10 [shape = 'u8[512]{0}', space=smem, size = 0x200, scoped, tag = 'input window, operand 3, single buffered']
    #allocation11 [shape = 'u8[4096]{0}', space=vmem, size = 0x1000, scoped, tag = 'output window, operand 0, single buffered']
    %11 = vsyncpa [#allocation4], 0
    %12 = vsyncpa [#allocation6], 0
    %13 = vsyncpa [#allocation9], 0
    %14 = vsyncpa [#allocation5], 0
    // Predicated region
    $region2: #{tpu_custom_call.1} parent=1 // pred_check
      _
    $region3: #{tpu_custom_call.1} parent=1 // pred_check_branch
      %16 = sbr.rel (0) target = $region5
    $region4: #{tpu_custom_call.1} parent=1 // pred_region
      %s18 = ssub.s32 128, 128
      %19 = vsyncadd [#allocation4], %s18
      %s21 = sshll.u32 [#allocation3], 4
      %s22 = int_to_ptr.vmem [resolvable:$true] %s21
      %24 = dma.hbm_to_vmem [thread:$0]  %s0, 128, %s22, [#allocation4]
    $region5: #{tpu_custom_call.1} parent=1 // pred_fallthru
      _
    // Predicated region
    $region6: #{tpu_custom_call.1} parent=1 // pred_check
      _
    $region7: #{tpu_custom_call.1} parent=1 // pred_check_branch
      %26 = sbr.rel (0) target = $region9
    $region8: #{tpu_custom_call.1} parent=1 // pred_region
      %s28 = ssub.s32 16, 16
      %29 = vsyncadd [#allocation6], %s28
      %s31 = sshll.u32 %s1, 4
      %s32 = int_to_ptr.vmem [resolvable:$true] %s31
      %34 = dma.vmem_to_smem %s32, 16, [#allocation7], [#allocation6]
    $region9: #{tpu_custom_call.1} parent=1 // pred_fallthru
      _
    // Predicated region
    $region10: #{tpu_custom_call.1} parent=1 // pred_check
      _
    $region11: #{tpu_custom_call.1} parent=1 // pred_check_branch
      %36 = sbr.rel (0) target = $region13
    $region12: #{tpu_custom_call.1} parent=1 // pred_region
      %s38 = ssub.s32 16, 16
      %39 = vsyncadd [#allocation9], %s38
      %s41 = sshll.u32 %s2, 4
      %s42 = int_to_ptr.vmem [resolvable:$true] %s41
      %44 = dma.vmem_to_smem %s42, 16, [#allocation8], [#allocation9]
    $region13: #{tpu_custom_call.1} parent=1 // pred_fallthru
      _
    // Predicated region
    $region14: #{tpu_custom_call.1} parent=1 // pred_check
      _
    $region15: #{tpu_custom_call.1} parent=1 // pred_check_branch
      %46 = sbr.rel (0) target = $region17
    $region16: #{tpu_custom_call.1} parent=1 // pred_region
      %s48 = ssub.s32 16, 16
      %49 = vsyncadd [#allocation9], %s48
      %s51 = sshll.u32 %s3, 4
      %s52 = int_to_ptr.vmem [resolvable:$true] %s51
      %54 = dma.vmem_to_smem %s52, 16, [#allocation10], [#allocation9]
    $region17: #{tpu_custom_call.1} parent=1 // pred_fallthru
      _
    // Predicated region
    $region18: #{tpu_custom_call.1} parent=1 // pred_check
      _
    $region19: #{tpu_custom_call.1} parent=1 // pred_check_branch
      %56 = sbr.rel (0) target = $region21
    $region20: #{tpu_custom_call.1} parent=1 // pred_region
      _
    $region21: #{tpu_custom_call.1} parent=1 // pred_fallthru
      _
    // Predicated region
    $region22: #{tpu_custom_call.1} parent=1 // pred_check
      _
    $region23: #{tpu_custom_call.1} parent=1 // pred_check_branch
      %58 = sbr.rel (0) target = $region25
    $region24: #{tpu_custom_call.1} parent=1 // pred_region
      %59 = dma.done [#allocation4], 128
    $region25: #{tpu_custom_call.1} parent=1 // pred_fallthru
      _
    // Predicated region
    $region26: #{tpu_custom_call.1} parent=1 // pred_check
      _
    $region27: #{tpu_custom_call.1} parent=1 // pred_check_branch
      %61 = sbr.rel (0) target = $region29
    $region28: #{tpu_custom_call.1} parent=1 // pred_region
      %62 = dma.done [#allocation6], 16
    $region29: #{tpu_custom_call.1} parent=1 // pred_fallthru
      _
    // Predicated region
    $region30: #{tpu_custom_call.1} parent=1 // pred_check
      _
    $region31: #{tpu_custom_call.1} parent=1 // pred_check_branch
      %64 = sbr.rel (0) target = $region33
    $region32: #{tpu_custom_call.1} parent=1 // pred_region
      %65 = dma.done [#allocation9], 16
    $region33: #{tpu_custom_call.1} parent=1 // pred_fallthru
      _
    // Predicated region
    $region34: #{tpu_custom_call.1} parent=1 // pred_check
      _
    $region35: #{tpu_custom_call.1} parent=1 // pred_check_branch
      %67 = sbr.rel (0) target = $region37
    $region36: #{tpu_custom_call.1} parent=1 // pred_region
      %68 = dma.done [#allocation9], 16
    $region37: #{tpu_custom_call.1} parent=1 // pred_fallthru
      _
    %69 = sfence
    %v70 = vld [vmem:[#allocation3] sm:$0xff]
    %s71 = sld [smem:[#allocation2]]
    %v72 = vstv %s71
    %v73 = vadd.f32 %v72, 0.0
    %s74 = sld [smem:[#allocation7]]
    %v75 = vstv %s74
    %v76 = vmul.f32 %v75, %v70
    %s77 = sld [smem:[#allocation8]]
    %v78 = vstv %s77
    %v79 = vadd.f32 %v76, %v78
    %v80 = vmax.f32 %v79, 0.0
    %s81 = sld [smem:[#allocation10]]
    %v82 = vstv %s81
    %v83 = vmul.f32 %v82, %v80
    %v84 = vadd.f32 %v73, %v83
    %s85 = sld [smem:[#allocation7 + $0x1]]
    %v86 = vstv %s85
    %v87 = vmul.f32 %v86, %v70
    %s88 = sld [smem:[#allocation8 + $0x1]]
    %v89 = vstv %s88
    %v90 = vadd.f32 %v87, %v89
    %v91 = vmax.f32 %v90, 0.0
    %s92 = sld [smem:[#allocation10 + $0x1]]
    %v93 = vstv %s92
    %v94 = vmul.f32 %v93, %v91
    %v95 = vadd.f32 %v84, %v94
    %s96 = sld [smem:[#allocation7 + $0x2]]
    %v97 = vstv %s96
    %v98 = vmul.f32 %v97, %v70
    %s99 = sld [smem:[#allocation8 + $0x2]]
    %v100 = vstv %s99
    %v101 = vadd.f32 %v98, %v100
    %v102 = vmax.f32 %v101, 0.0
    %s103 = sld [smem:[#allocation10 + $0x2]]
    %v104 = vstv %s103
    %v105 = vmul.f32 %v104, %v102
    %v106 = vadd.f32 %v95, %v105
    %s107 = sld [smem:[#allocation7 + $0x3]]
    %v108 = vstv %s107
    %v109 = vmul.f32 %v108, %v70
    %s110 = sld [smem:[#allocation8 + $0x3]]
    %v111 = vstv %s110
    %v112 = vadd.f32 %v109, %v111
    %v113 = vmax.f32 %v112, 0.0
    %s114 = sld [smem:[#allocation10 + $0x3]]
    %v115 = vstv %s114
    %v116 = vmul.f32 %v115, %v113
    %v117 = vadd.f32 %v106, %v116
    %s118 = sld [smem:[#allocation7 + $0x4]]
    %v119 = vstv %s118
    %v120 = vmul.f32 %v119, %v70
    %s121 = sld [smem:[#allocation8 + $0x4]]
    %v122 = vstv %s121
    %v123 = vadd.f32 %v120, %v122
    %v124 = vmax.f32 %v123, 0.0
    %s125 = sld [smem:[#allocation10 + $0x4]]
    %v126 = vstv %s125
    %v127 = vmul.f32 %v126, %v124
    %v128 = vadd.f32 %v117, %v127
    %s129 = sld [smem:[#allocation7 + $0x5]]
    %v130 = vstv %s129
    %v131 = vmul.f32 %v130, %v70
    %s132 = sld [smem:[#allocation8 + $0x5]]
    %v133 = vstv %s132
    %v134 = vadd.f32 %v131, %v133
    %v135 = vmax.f32 %v134, 0.0
    %s136 = sld [smem:[#allocation10 + $0x5]]
    %v137 = vstv %s136
    %v138 = vmul.f32 %v137, %v135
    %v139 = vadd.f32 %v128, %v138
    %s140 = sld [smem:[#allocation7 + $0x6]]
    %v141 = vstv %s140
    %v142 = vmul.f32 %v141, %v70
    %s143 = sld [smem:[#allocation8 + $0x6]]
    %v144 = vstv %s143
    %v145 = vadd.f32 %v142, %v144
    %v146 = vmax.f32 %v145, 0.0
    %s147 = sld [smem:[#allocation10 + $0x6]]
    %v148 = vstv %s147
    %v149 = vmul.f32 %v148, %v146
    %v150 = vadd.f32 %v139, %v149
    %s151 = sld [smem:[#allocation7 + $0x7]]
    %v152 = vstv %s151
    %v153 = vmul.f32 %v152, %v70
    %s154 = sld [smem:[#allocation8 + $0x7]]
    %v155 = vstv %s154
    %v156 = vadd.f32 %v153, %v155
    %v157 = vmax.f32 %v156, 0.0
    %s158 = sld [smem:[#allocation10 + $0x7]]
    %v159 = vstv %s158
    %v160 = vmul.f32 %v159, %v157
    %v161 = vadd.f32 %v150, %v160
    %s162 = sld [smem:[#allocation7 + $0x8]]
    %v163 = vstv %s162
    %v164 = vmul.f32 %v163, %v70
    %s165 = sld [smem:[#allocation8 + $0x8]]
    %v166 = vstv %s165
    %v167 = vadd.f32 %v164, %v166
    %v168 = vmax.f32 %v167, 0.0
    %s169 = sld [smem:[#allocation10 + $0x8]]
    %v170 = vstv %s169
    %v171 = vmul.f32 %v170, %v168
    %v172 = vadd.f32 %v161, %v171
    %s173 = sld [smem:[#allocation7 + $0x9]]
    %v174 = vstv %s173
    %v175 = vmul.f32 %v174, %v70
    %s176 = sld [smem:[#allocation8 + $0x9]]
    %v177 = vstv %s176
    %v178 = vadd.f32 %v175, %v177
    %v179 = vmax.f32 %v178, 0.0
    %s180 = sld [smem:[#allocation10 + $0x9]]
    %v181 = vstv %s180
    %v182 = vmul.f32 %v181, %v179
    %v183 = vadd.f32 %v172, %v182
    %184 = vst [vmem:[#allocation11] sm:$0xff] %v183
    // Predicated region
    $region38: #{tpu_custom_call.1} parent=1 // pred_check
      _
    $region39: #{tpu_custom_call.1} parent=1 // pred_check_branch
      %186 = sbr.rel (0) target = $region41
    $region40: #{tpu_custom_call.1} parent=1 // pred_region
      %s188 = ssub.s32 128, 128
      %189 = vsyncadd [#allocation5], %s188
      %s191 = sshll.u32 [#allocation11], 4
      %s192 = int_to_ptr.vmem [resolvable:$true] %s191
      %194 = dma.vmem_to_hbm [thread:$0]  %s192, 128, %s5, [#allocation5]
    $region41: #{tpu_custom_call.1} parent=1 // pred_fallthru
      _
    // Predicated region
    $region42: #{tpu_custom_call.1} parent=1 // pred_check
      _
    $region43: #{tpu_custom_call.1} parent=1 // pred_check_branch
      %196 = sbr.rel (0) target = $region45
    $region44: #{tpu_custom_call.1} parent=1 // pred_region
      %197 = dma.done [#allocation5], 128
    $region45: #{tpu_custom_call.1} parent=1 // pred_fallthru
      _
    %198 = vsyncpa [#allocation4], 1
    %199 = vsyncpa [#allocation5], 1
    %200 = vsyncpa [#allocation6], 1
    %201 = vsyncpa [#allocation9], 1

</llo_original>
